<compile_context>
chip_gen: v7x
topology: tpu7x:2x2x1
jax: 0.10.0
libtpu: 0.0.40
codegen_flags: <defaults>
</compile_context>

<pallas_src>
from functools import partial

import jax
import jax.numpy as jnp
from jax.experimental import pallas as pl
from jax.experimental.pallas import tpu as pltpu


# ----------------------------- budgets & tiling ----------------------------

def _tpu_vmem_capacity_bytes():
    """Physical VMEM per core; conservative default if the query fails."""
    try:
        cap = int(pltpu.get_tpu_info().vmem_capacity_bytes)
        if cap > 0:
            return cap
    except Exception:
        pass
    return 64 * 1024 * 1024  # v7x per-TC value: safe lower bound everywhere


def _budgets():
    """(live double-buffered block-bytes target, vmem_limit_bytes)."""
    cap = _tpu_vmem_capacity_bytes()
    budget = max(2 * 1024 * 1024, min(cap // 4, 16 * 1024 * 1024))
    vmem_limit = max(2 * budget, min(cap // 2, 32 * 1024 * 1024))
    return budget, vmem_limit


def _pick_lane_tile(total, max_elems):
    """Lane-dim tile: full extent if it fits, else the largest 128-multiple
    <= max_elems.  Returns (tile, ragged); ragged means the last grid step is
    partially out of bounds and must be masked by the caller (inputs only)."""
    max_elems = max(128, int(max_elems))
    if total <= max_elems:
        return total, False
    t = (max_elems // 128) * 128
    return t, (total % t != 0)


def _pick_sublane_tile(m):
    """Tile the M axis only when it is big enough to split (v7x megacore);
    the block's second-last dim must be a multiple of 8 or the full extent."""
    if m >= 16 and m % 8 == 0:
        return 8
    return m


def _pick_batch_tile(b, cap):
    """Largest divisor of b that is <= cap (>= 1)."""
    cap = max(1, min(b, int(cap)))
    for t in range(cap, 0, -1):
        if b % t == 0:
            return t
    return 1


# ----------------------------- Pallas kernels ------------------------------

def _mbstd_stat_kernel(x_ref, o_ref, *, inv_d, d_total, ragged):
    """Per (replica, channel-group) statistic.

    x_ref: (G, Mt, dt)  -- reduced group axis on the leading (non-vreg) dim,
                           feature tile dt on lanes, in the input dtype.
    o_ref: (Mt, 1)      -- resident f32 accumulator across the D-tile axis.
    """
    j = pl.program_id(1)

    @pl.when(j == 0)
    def _init():
        o_ref[...] = jnp.zeros_like(o_ref)

    x = x_ref[...].astype(jnp.float32)                       # (G, Mt, dt)
    dt = x.shape[-1]
    if ragged:
        # Last D tile may extend past D: padded lanes hold undefined values.
        lane = jax.lax.broadcasted_iota(jnp.int32, x.shape[1:], 1)   # (Mt, dt)
        valid = (j * dt + lane) < d_total
        x = jnp.where(valid, x, 0.0)                         # broadcasts over G

    mean = jnp.mean(x, axis=0)                               # group mean (VPU)
    var = jnp.mean(jnp.square(x - mean), axis=0)             # population var
    std = jnp.sqrt(var + 1e-8)                               # (Mt, dt)
    if ragged:
        std = jnp.where(valid, std, 0.0)                     # drop sqrt(eps) bias
    # partial mean over D, accumulated per tile (inv_d uses the true D)
    o_ref[...] += jnp.sum(std, axis=-1, keepdims=True) * inv_d


def _concat_stat_kernel(x_ref, s_ref, o_ref):
    """Fused broadcast + channel concat.

    x_ref: (Bt, C, HWt)    input tile (Bt batch samples)
    s_ref: (b, f, 1)       full per-sample statistic (f32), resident all grid
    o_ref: (Bt, C+f, HWt)  output tile: channels [0,C) copy, [C,C+f) stat
    """
    i = pl.program_id(0)
    bt, cin, hwt = x_ref.shape
    f = s_ref.shape[1]
    o_ref[:, :cin, :] = x_ref[...].astype(o_ref.dtype)
    start = pl.multiple_of(i * bt, bt)
    s = s_ref[pl.ds(start, bt), :, :].astype(jnp.float32)    # (Bt, f, 1)
    o_ref[:, cin:, :] = jnp.broadcast_to(s, (bt, f, hwt)).astype(o_ref.dtype)


# ----------------------------- forward -------------------------------------

def minibatch_std_mean(x, *, groups=4, num_channels=1,
                       d_tile=None, hw_tile=None, b_tile=None,
                       stat_buffers=None):
    """MinibatchStdMean forward. x: (b, C, h, w) NCHW. Returns (b, C+f, h, w)."""
    b, C, h, w = x.shape
    G = min(b, groups) if groups is not None else b
    f = num_channels
    # torch.reshape(G, -1, f, c, h, w) would fail on ragged shapes -> assert.
    assert b % G == 0, "batch size must be divisible by the group size"
    assert C % f == 0, "channel count must be divisible by num_channels"
    m = b // G
    c_per_f = C // f
    D = c_per_f * h * w
    M = m * f
    HW = h * w
    isz = x.dtype.itemsize
    budget, vmem_limit = _budgets()

    # --- kernel 1: per-(replica, channel-group) statistic -------------------
    # Free reshape only (contiguous split/merge of adjacent dims): batch splits
    # as (G outer, m inner), channels as (f outer, c_per_f inner), so
    # (b, C, h, w) -> (G, M, D) with M = m*f, D = c_per_f*h*w.  No transpose,
    # no cast: the f32 upcast happens inside the kernel.
    xg = x.reshape(G, M, D)

    Mt = _pick_sublane_tile(M)
    n_m = M // Mt
    d_max = d_tile if d_tile is not None else budget // (2 * G * Mt * isz)
    dt, ragged = _pick_lane_tile(D, d_max)
    n_d = pl.cdiv(D, dt)

    stat_idx = lambda i, j: (0, i, j)
    if stat_buffers is not None:
        # Optional deeper pipelining (e.g. 3 on v7x) once profiling shows
        # exposed DMA; not exercised by default.
        stat_in_spec = pl.BlockSpec((G, Mt, dt), stat_idx,
                                    pipeline_mode=pl.Buffered(stat_buffers))
    else:
        stat_in_spec = pl.BlockSpec((G, Mt, dt), stat_idx)

    # TODO(synk): when M == 1 there is no "parallel" axis for v7x's second
    # TensorCore; a cross-core D-split with a tiny combine is not implemented.
    stat = pl.pallas_call(
        partial(_mbstd_stat_kernel, inv_d=1.0 / D, d_total=D, ragged=ragged),
        out_shape=jax.ShapeDtypeStruct((M, 1), jnp.float32),
        grid=(n_m, n_d),
        in_specs=[stat_in_spec],
        out_specs=pl.BlockSpec((Mt, 1), lambda i, j: (i, 0)),
        compiler_params=pltpu.CompilerParams(
            dimension_semantics=("parallel", "arbitrary"),
            vmem_limit_bytes=vmem_limit),
    )(xg)

    # --- kernel 2: fused broadcast + channel concat --------------------------
    # Expand stat (m, f) to per-batch (b, f, 1): batch index g*m + r gets
    # stat[r, fi] (matches torch's .repeat(G, 1, h, w)).  Tiny (b*f) glue.
    stat_b = jnp.tile(stat.reshape(1, m, f), (G, 1, 1)).reshape(b, f, 1)

    per_sample = (2 * C + f) * HW * isz          # x block + out block, per sample
    bt_cap = b_tile if b_tile is not None else min(8, max(1, budget // (2 * per_sample)))
    Bt = _pick_batch_tile(b, bt_cap)
    hw_max = hw_tile if hw_tile is not None else budget // (2 * Bt * (2 * C + f) * isz)
    hwt, _ = _pick_lane_tile(HW, hw_max)
    n_hw = pl.cdiv(HW, hwt)
    # A ragged last HW tile needs no mask: the copy never uses OOB input for an
    # in-bounds output element, and OOB output writes are dropped by Pallas.

    x_flat = x.reshape(b, C, HW)
    y = pl.pallas_call(
        _concat_stat_kernel,
        out_shape=jax.ShapeDtypeStruct((b, C + f, HW), x.dtype),
        grid=(pl.cdiv(b, Bt), n_hw),
        in_specs=[
            pl.BlockSpec((Bt, C, hwt), lambda i, j: (i, 0, j)),
            # constant index_map: whole statistic stays resident for the grid
            pl.BlockSpec((b, f, 1), lambda i, j: (0, 0, 0)),
        ],
        out_specs=pl.BlockSpec((Bt, C + f, hwt), lambda i, j: (i, 0, j)),
        compiler_params=pltpu.CompilerParams(
            dimension_semantics=("parallel", "parallel"),
            vmem_limit_bytes=vmem_limit),
    )(x_flat, stat_b)
    return y.reshape(b, C + f, h, w)


# ----------------------------- pure-JAX reference ---------------------------

def _mbstd_ref(x, *, groups=4, num_channels=1):
    b, C, h, w = x.shape
    G = min(b, groups) if groups is not None else b
    f = num_channels
    c = C // f
    y = x.reshape(G, -1, f, c, h, w)
    y = y - jnp.mean(y, axis=0)
    y = jnp.mean(jnp.square(y), axis=0)
    y = jnp.sqrt(y + 1e-8)
    y = jnp.mean(y, axis=(2, 3, 4))
    y = y.reshape(-1, f, 1, 1)
    y = jnp.tile(y, (G, 1, h, w))
    return jnp.concatenate([x, y], axis=1)


# ----------------------------- main -----------------------------------------

if __name__ == "__main__":
    key = jax.random.PRNGKey(0)
    k1, k2, k3 = jax.random.split(key, 3)

    # case 1: primary small shape (b < groups -> G = b), single-tile fast path.
    x1 = jax.random.normal(k1, (2, 4, 16, 16), jnp.float32)  # NCHW
    out1 = jax.jit(partial(minibatch_std_mean, groups=4, num_channels=1))(x1)
    jax.block_until_ready(out1)
    assert out1.shape == (2, 5, 16, 16)
    ref1 = _mbstd_ref(x1, groups=4, num_channels=1)
    assert bool(jnp.allclose(out1, ref1, atol=1e-4, rtol=1e-4)), "mismatch (case 1)"

    # case 2: forced tiling — ragged D reduction (D=2048 over 384-wide tiles,
    # masked last tile), batch-blocked + HW-tiled concat.
    x2 = jax.random.normal(k2, (4, 8, 16, 16), jnp.float32)
    out2 = jax.jit(partial(minibatch_std_mean, groups=4, num_channels=1,
                           d_tile=384, hw_tile=128, b_tile=2))(x2)
    jax.block_until_ready(out2)
    assert out2.shape == (4, 9, 16, 16)
    ref2 = _mbstd_ref(x2, groups=4, num_channels=1)
    assert bool(jnp.allclose(out2, ref2, atol=1e-4, rtol=1e-4)), "mismatch (case 2)"

    # case 3: num_channels > 1.
    x3 = jax.random.normal(k3, (2, 4, 16, 16), jnp.float32)
    out3 = jax.jit(partial(minibatch_std_mean, groups=4, num_channels=2))(x3)
    jax.block_until_ready(out3)
    assert out3.shape == (2, 6, 16, 16)
    ref3 = _mbstd_ref(x3, groups=4, num_channels=2)
    assert bool(jnp.allclose(out3, ref3, atol=1e-4, rtol=1e-4)), "mismatch (case 3)"

    print("KERNEL_OK")
</pallas_src>

<mosaic_0001>
module attributes {stable_mosaic.version = 11 : i64} {
  func.func @_mbstd_stat_kernel(%arg0: i32, %arg1: i32, %arg2: memref<2x1x1024xf32, #tpu.memory_space<vmem>>, %arg3: memref<1x1xf32, #tpu.memory_space<vmem>>) attributes {dimension_semantics = [#tpu.dimension_semantics<parallel>, #tpu.dimension_semantics<arbitrary>], iteration_bounds = array<i64: 1, 1>, scalar_prefetch = 0 : i64, scratch_operands = 0 : i64, tpu.core_type = #tpu.core_type<tc>, window_params = [{transform_indices = @transform_0, window_bounds = array<i64: 2, 1, 1024>}, {transform_indices = @transform_1, window_bounds = array<i64: 1, 1>}]} {
    %c0_i32 = arith.constant 0 : i32
    %0 = arith.cmpi eq, %arg1, %c0_i32 : i32
    %1 = arith.extui %0 : i1 to i32
    %c0_i32_0 = arith.constant 0 : i32
    %2 = arith.cmpi ne, %1, %c0_i32_0 : i32
    scf.if %2 {
      %cst_13 = arith.constant 0.000000e+00 : f32
      %24 = vector.broadcast %cst_13 : f32 to vector<1x1xf32>
      %c0_14 = arith.constant 0 : index
      %c0_15 = arith.constant 0 : index
      %25 = vector.load %arg3[%c0_14, %c0_15] : memref<1x1xf32, #tpu.memory_space<vmem>>, vector<1x1xf32>
      tpu.vector_store %arg3[%c0_14, %c0_15], %24 {strides = array<i32>} : memref<1x1xf32, #tpu.memory_space<vmem>>, vector<1x1xf32>,
    } else {
    }
    %c0 = arith.constant 0 : index
    %c0_1 = arith.constant 0 : index
    %c0_2 = arith.constant 0 : index
    %3 = vector.load %arg2[%c0, %c0_1, %c0_2] : memref<2x1x1024xf32, #tpu.memory_space<vmem>>, vector<2x1x1024xf32>
    %cst = arith.constant dense<0.000000e+00> : vector<1x1024xf32>
    %4 = vector.multi_reduction <add>, %3, %cst [0] : vector<2x1x1024xf32> to vector<1x1024xf32>
    %cst_3 = arith.constant 2.000000e+00 : f32
    %5 = vector.broadcast %cst_3 : f32 to vector<1x1024xf32>
    %6 = arith.divf %4, %5 : vector<1x1024xf32>
    %7 = vector.shape_cast %6 : vector<1x1024xf32> to vector<1x1x1024xf32>
    %8 = vector.broadcast %7 : vector<1x1x1024xf32> to vector<2x1x1024xf32>
    %9 = arith.subf %3, %8 : vector<2x1x1024xf32>
    %10 = arith.mulf %9, %9 : vector<2x1x1024xf32>
    %cst_4 = arith.constant dense<0.000000e+00> : vector<1x1024xf32>
    %11 = vector.multi_reduction <add>, %10, %cst_4 [0] : vector<2x1x1024xf32> to vector<1x1024xf32>
    %cst_5 = arith.constant 2.000000e+00 : f32
    %12 = vector.broadcast %cst_5 : f32 to vector<1x1024xf32>
    %13 = arith.divf %11, %12 : vector<1x1024xf32>
    %cst_6 = arith.constant 9.99999993E-9 : f32
    %14 = vector.broadcast %cst_6 : f32 to vector<1x1024xf32>
    %15 = arith.addf %13, %14 : vector<1x1024xf32>
    %16 = math.sqrt %15 : vector<1x1024xf32>
    %c0_7 = arith.constant 0 : index
    %c0_8 = arith.constant 0 : index
    %17 = vector.load %arg3[%c0_7, %c0_8] : memref<1x1xf32, #tpu.memory_space<vmem>>, vector<1x1xf32>
    %cst_9 = arith.constant dense<0.000000e+00> : vector<1xf32>
    %18 = vector.multi_reduction <add>, %16, %cst_9 [1] : vector<1x1024xf32> to vector<1xf32>
    %19 = vector.shape_cast %18 : vector<1xf32> to vector<1x1xf32>
    %cst_10 = arith.constant 9.765625E-4 : f32
    %20 = vector.broadcast %cst_10 : f32 to vector<1x1xf32>
    %21 = arith.mulf %19, %20 : vector<1x1xf32>
    %22 = arith.addf %17, %21 : vector<1x1xf32>
    %c0_11 = arith.constant 0 : index
    %c0_12 = arith.constant 0 : index
    %23 = vector.load %arg3[%c0_11, %c0_12] : memref<1x1xf32, #tpu.memory_space<vmem>>, vector<1x1xf32>
    tpu.vector_store %arg3[%c0_11, %c0_12], %22 {strides = array<i32>} : memref<1x1xf32, #tpu.memory_space<vmem>>, vector<1x1xf32>,
    return
  }
  func.func @transform_0(%arg0: i32, %arg1: i32) -> (i32, i32, i32) {
    %c0_i32 = arith.constant 0 : i32
    %c0_i32_0 = arith.constant 0 : i32
    return %c0_i32, %arg0, %arg1 : i32, i32, i32
  }
  func.func @transform_1(%arg0: i32, %arg1: i32) -> (i32, i32) {
    %c0_i32 = arith.constant 0 : i32
    %c0_i32_0 = arith.constant 0 : i32
    return %arg0, %c0_i32 : i32, i32
  }
}

module attributes {stable_mosaic.version = 11 : i64} {
  func.func @_concat_stat_kernel(%arg0: i32, %arg1: i32, %arg2: memref<2x4x256xf32, #tpu.memory_space<vmem>>, %arg3: memref<2x1x1xf32, #tpu.memory_space<vmem>>, %arg4: memref<2x5x256xf32, #tpu.memory_space<vmem>>) attributes {dimension_semantics = [#tpu.dimension_semantics<parallel>, #tpu.dimension_semantics<parallel>], iteration_bounds = array<i64: 1, 1>, scalar_prefetch = 0 : i64, scratch_operands = 0 : i64, tpu.core_type = #tpu.core_type<tc>, window_params = [{transform_indices = @transform_0, window_bounds = array<i64: 2, 4, 256>}, {pipeline_mode = #tpu.pipeline_mode<synchronous>, transform_indices = @transform_1, window_bounds = array<i64: 2, 1, 1>}, {transform_indices = @transform_2, window_bounds = array<i64: 2, 5, 256>}]} {
    %c0 = arith.constant 0 : index
    %c0_0 = arith.constant 0 : index
    %c0_1 = arith.constant 0 : index
    %0 = vector.load %arg2[%c0, %c0_0, %c0_1] : memref<2x4x256xf32, #tpu.memory_space<vmem>>, vector<2x4x256xf32>
    %c0_2 = arith.constant 0 : index
    %c0_3 = arith.constant 0 : index
    %c0_4 = arith.constant 0 : index
    %1 = vector.load %arg4[%c0_2, %c0_3, %c0_4] : memref<2x5x256xf32, #tpu.memory_space<vmem>>, vector<2x4x256xf32>
    tpu.vector_store %arg4[%c0_2, %c0_3, %c0_4], %0 {strides = array<i32>} : memref<2x5x256xf32, #tpu.memory_space<vmem>>, vector<2x4x256xf32>,
    %c2_i32 = arith.constant 2 : i32
    %2 = arith.muli %arg0, %c2_i32 : i32
    %3 = tpu.assume_multiple %2, 2 : i32
    %4 = arith.index_cast %3 : i32 to index
    %c0_5 = arith.constant 0 : index
    %c0_6 = arith.constant 0 : index
    %5 = vector.load %arg3[%4, %c0_5, %c0_6] : memref<2x1x1xf32, #tpu.memory_space<vmem>>, vector<2x1x1xf32>
    %6 = vector.shape_cast %5 : vector<2x1x1xf32> to vector<2x1x1xf32>
    %7 = vector.broadcast %6 : vector<2x1x1xf32> to vector<2x1x256xf32>
    %c0_7 = arith.constant 0 : index
    %c4 = arith.constant 4 : index
    %c0_8 = arith.constant 0 : index
    %8 = vector.load %arg4[%c0_7, %c4, %c0_8] : memref<2x5x256xf32, #tpu.memory_space<vmem>>, vector<2x1x256xf32>
    tpu.vector_store %arg4[%c0_7, %c4, %c0_8], %7 {strides = array<i32>} : memref<2x5x256xf32, #tpu.memory_space<vmem>>, vector<2x1x256xf32>,
    return
  }
  func.func @transform_0(%arg0: i32, %arg1: i32) -> (i32, i32, i32) {
    %c0_i32 = arith.constant 0 : i32
    %c0_i32_0 = arith.constant 0 : i32
    return %arg0, %c0_i32, %arg1 : i32, i32, i32
  }
  func.func @transform_1(%arg0: i32, %arg1: i32) -> (i32, i32, i32) {
    %c0_i32 = arith.constant 0 : i32
    %c0_i32_0 = arith.constant 0 : i32
    %c0_i32_1 = arith.constant 0 : i32
    %c0_i32_2 = arith.constant 0 : i32
    return %c0_i32, %c0_i32_0, %c0_i32_1 : i32, i32, i32
  }
  func.func @transform_2(%arg0: i32, %arg1: i32) -> (i32, i32, i32) {
    %c0_i32 = arith.constant 0 : i32
    %c0_i32_0 = arith.constant 0 : i32
    return %arg0, %c0_i32, %arg1 : i32, i32, i32
  }
}

</mosaic_0001>

<llo_original>
// kernel: minibatch_std_mean.3
$region0: #{minibatch_std_mean.3}
  #allocation0 [shape = 'u32[]', space=smem, size = 0x4, offset = 0x4, fixed_abs, tag = 'smem constant byte address 0x4 - core index']
  #allocation1 [shape = 'u32[144,128]{1,0:T(1,128)}', space=vmem, size = 0x12000, scoped, tag = 'internal scratch']
  %s0 = inlined_call_operand.vmem [shape: f32[2,4,256], index: 0, kind: input, shape index: {}]
  %s1 = inlined_call_operand.vmem [shape: f32[2,1,1], index: 1, kind: input, shape index: {}]
  %s2 = inlined_call_operand.vmem [shape: f32[2,5,256], index: 2, kind: output, shape index: {}]
  %s3 = sld [smem:[#allocation0]]
  $region18: #{minibatch_std_mean.3} parent=0
    _
  %s5 = ssub.s32 1, %s3
  %s6 = scalar_select 0, %s5, %s3
  // Predicated region
  $region2: #{minibatch_std_mean.3} parent=0 // pred_check
    _
  $region3: #{minibatch_std_mean.3} parent=0 // pred_check_branch
    %8 = sbr.rel (0) target = $region5
  $region4: #{minibatch_std_mean.3} parent=0 // pred_region
    _
  $region5: #{minibatch_std_mean.3} parent=0 // pred_fallthru
    _
  // Predicated region
  $region6: #{minibatch_std_mean.3} parent=0 // pred_check
    _
  $region7: #{minibatch_std_mean.3} parent=0 // pred_check_branch
    %10 = sbr.rel (0) target = $region9
  $region8: #{minibatch_std_mean.3} parent=0 // pred_region
    _
  $region9: #{minibatch_std_mean.3} parent=0 // pred_fallthru
    _
  %v11 = vld [vmem:[%s0] sm:$0xff]
  %v12 = vld [vmem:[%s0 + $0x8] sm:$0xff]
  %v15 = vcombine.high %v11, %v11
  %v16 = vcombine.high %v12, %v12
  %19 = vst [vmem:[%s2] sm:$0xf] %v11
  %20 = vst [vmem:[%s2 + $0x8] sm:$0xf] %v15
  %21 = vst [vmem:[%s2 + $0x10] sm:$0xf] %v12
  %22 = vst [vmem:[%s2 + $0x18] sm:$0xf] %v16
  %s23 = smul.u32 0, 2
  %s24 = scalar_lea.vmem %s1, %s23
  %v25 = vld [vmem:[%s24] sm:$0x1]
  %v26 = vld [vmem:[%s24 + $0x1] sm:$0x1]
  %28 = vset.pattern.permute.xlu0 0
  %29 = vperm.xlu0 %28, %v25
  %v30 = vpop.permute.xlu0 %29
  %v32 = vlaneseq
  %v33 = vshrl.u32 %v32, 7
  %v34 = vsub.s32 0, %v33
  %v35 = vrot.slane %v30, %v34
  %37 = vset.pattern.permute.xlu0 0
  %38 = vperm.xlu0 %37, %v26
  %v39 = vpop.permute.xlu0 %38
  %v41 = vlaneseq
  %v42 = vshrl.u32 %v41, 7
  %v43 = vsub.s32 0, %v42
  %v44 = vrot.slane %v39, %v43
  %v45 = vlaneseq
  %vm46 = vcmp.ge.s32.totalorder %v45, 0
  %vm47 = vcmp.lt.s32.totalorder %v45, 256
  %vm48 = vmand %vm46, %vm47
  %s49 = scalar_lea.vmem %s2, 4
  %50 = vst.msk [vmem:[%s49] ss:$8 sm:$0x3] %vm48, %v35
  %51 = vst.msk [vmem:[%s49] ss:$8 sm:$0x0] %vm48, %v35
  %s52 = scalar_lea.vmem %s2, 20
  %53 = vst.msk [vmem:[%s52] ss:$8 sm:$0x3] %vm48, %v44
  %54 = vst.msk [vmem:[%s52] ss:$8 sm:$0x0] %vm48, %v44
  // Predicated region
  $region10: #{minibatch_std_mean.3} parent=0 // pred_check
    _
  $region11: #{minibatch_std_mean.3} parent=0 // pred_check_branch
    %56 = sbr.rel (0) target = $region13
  $region12: #{minibatch_std_mean.3} parent=0 // pred_region
    _
  $region13: #{minibatch_std_mean.3} parent=0 // pred_fallthru
    _
  // Predicated region
  $region14: #{minibatch_std_mean.3} parent=0 // pred_check
    _
  $region15: #{minibatch_std_mean.3} parent=0 // pred_check_branch
    %58 = sbr.rel (0) target = $region17
  $region16: #{minibatch_std_mean.3} parent=0 // pred_region
    _
  $region17: #{minibatch_std_mean.3} parent=0 // pred_fallthru
    _

// kernel: minibatch_std_mean.2
$region0: #{minibatch_std_mean.2}
  #allocation0 [shape = 'u32[]', space=smem, size = 0x4, offset = 0x4, fixed_abs, tag = 'smem constant byte address 0x4 - core index']
  #allocation1 [shape = 'u32[144,128]{1,0:T(1,128)}', space=vmem, size = 0x12000, scoped, tag = 'internal scratch']
  %s0 = inlined_call_operand.vmem [shape: f32[2,1,1024], index: 0, kind: input, shape index: {}]
  %s1 = inlined_call_operand.hbm [shape: f32[1,1], index: 1, kind: output, shape index: {}]
  %s2 = sld [smem:[#allocation0]]
  $region18: #{minibatch_std_mean.2} parent=0
    _
  %s4 = ssub.s32 1, %s2
  %s5 = scalar_select 0, %s4, %s2
  $region1: #{minibatch_std_mean.2} parent=0
    #allocation2 [shape = 'u8[512]{0}', space=vmem, size = 0x400, scoped, tag = 'output window, operand 0, single buffered']
    #allocation3 [shape = 's32[1]{0}', space=sflag, size = 0x4, scoped, tag = 'scoped memory for minibatch_std_mean.2']
    %6 = vsyncpa [#allocation3], 0
    // Predicated region
    $region2: #{minibatch_std_mean.2} parent=1 // pred_check
      _
    $region3: #{minibatch_std_mean.2} parent=1 // pred_check_branch
      %8 = sbr.rel (0) target = $region5
    $region4: #{minibatch_std_mean.2} parent=1 // pred_region
      _
    $region5: #{minibatch_std_mean.2} parent=1 // pred_fallthru
      _
    %p9 = scmp.eq.s32.totalorder 0, 0
    // Predicated region
    $region6: #{minibatch_std_mean.2} parent=1 // pred_check
      %p10 = pneg %p9
    $region7: #{minibatch_std_mean.2} parent=1 // pred_check_branch
      %12 = sbr.rel (%p10) target = $region9
    $region8: #{minibatch_std_mean.2} parent=1 // pred_region
      %vm13 = vcmask 0
      %14 = vst.msk [vmem:[#allocation2] sm:$0x1] %vm13, 0.0
    $region9: #{minibatch_std_mean.2} parent=1 // pred_fallthru
      _
    %v15 = vld [vmem:[%s0] sm:$0xff]
    %v16 = vld [vmem:[%s0 + $0x8] sm:$0xff]
    %v19 = vlaneseq
    %v20 = vshrl.u32 %v19, 7
    %v21 = vsub.s32 0, %v20
    %v22 = vrot.slane %v15, %v21
    %v23 = vlaneseq
    %v24 = vshrl.u32 %v23, 7
    %v25 = vsub.s32 1, %v24
    %v26 = vrot.slane %v15, %v25
    %v27 = vlaneseq
    %v28 = vshrl.u32 %v27, 7
    %v29 = vsub.s32 2, %v28
    %v30 = vrot.slane %v15, %v29
    %v31 = vlaneseq
    %v32 = vshrl.u32 %v31, 7
    %v33 = vsub.s32 3, %v32
    %v34 = vrot.slane %v15, %v33
    %v35 = vlaneseq
    %v36 = vshrl.u32 %v35, 7
    %v37 = vsub.s32 4, %v36
    %v38 = vrot.slane %v15, %v37
    %v39 = vlaneseq
    %v40 = vshrl.u32 %v39, 7
    %v41 = vsub.s32 5, %v40
    %v42 = vrot.slane %v15, %v41
    %v43 = vlaneseq
    %v44 = vshrl.u32 %v43, 7
    %v45 = vsub.s32 6, %v44
    %v46 = vrot.slane %v15, %v45
    %v47 = vlaneseq
    %v48 = vshrl.u32 %v47, 7
    %v49 = vsub.s32 7, %v48
    %v50 = vrot.slane %v15, %v49
    %v51 = vlaneseq
    %v52 = vshrl.u32 %v51, 7
    %v53 = vsub.s32 0, %v52
    %v54 = vrot.slane %v16, %v53
    %v55 = vlaneseq
    %v56 = vshrl.u32 %v55, 7
    %v57 = vsub.s32 1, %v56
    %v58 = vrot.slane %v16, %v57
    %v59 = vlaneseq
    %v60 = vshrl.u32 %v59, 7
    %v61 = vsub.s32 2, %v60
    %v62 = vrot.slane %v16, %v61
    %v63 = vlaneseq
    %v64 = vshrl.u32 %v63, 7
    %v65 = vsub.s32 3, %v64
    %v66 = vrot.slane %v16, %v65
    %v67 = vlaneseq
    %v68 = vshrl.u32 %v67, 7
    %v69 = vsub.s32 4, %v68
    %v70 = vrot.slane %v16, %v69
    %v71 = vlaneseq
    %v72 = vshrl.u32 %v71, 7
    %v73 = vsub.s32 5, %v72
    %v74 = vrot.slane %v16, %v73
    %v75 = vlaneseq
    %v76 = vshrl.u32 %v75, 7
    %v77 = vsub.s32 6, %v76
    %v78 = vrot.slane %v16, %v77
    %v79 = vlaneseq
    %v80 = vshrl.u32 %v79, 7
    %v81 = vsub.s32 7, %v80
    %v82 = vrot.slane %v16, %v81
    %vm99 = vcmask 1040384
    %v100 = vsel %vm99, %v22, 0.0
    %v101 = vsel %vm99, %v54, 0.0
    %v102 = vadd.f32 %v100, %v101
    %v103 = vsel %vm99, %v26, 0.0
    %v104 = vsel %vm99, %v58, 0.0
    %v105 = vadd.f32 %v103, %v104
    %v106 = vsel %vm99, %v30, 0.0
    %v107 = vsel %vm99, %v62, 0.0
    %v108 = vadd.f32 %v106, %v107
    %v109 = vsel %vm99, %v34, 0.0
    %v110 = vsel %vm99, %v66, 0.0
    %v111 = vadd.f32 %v109, %v110
    %v112 = vsel %vm99, %v38, 0.0
    %v113 = vsel %vm99, %v70, 0.0
    %v114 = vadd.f32 %v112, %v113
    %v115 = vsel %vm99, %v42, 0.0
    %v116 = vsel %vm99, %v74, 0.0
    %v117 = vadd.f32 %v115, %v116
    %v118 = vsel %vm99, %v46, 0.0
    %v119 = vsel %vm99, %v78, 0.0
    %v120 = vadd.f32 %v118, %v119
    %v121 = vsel %vm99, %v50, 0.0
    %v122 = vsel %vm99, %v82, 0.0
    %v123 = vadd.f32 %v121, %v122
    %v124 = vrcp.pop 2.0
    %v125 = vmul.f32 %v102, %v124
    %v126 = vmul.f32 %v105, %v124
    %v127 = vmul.f32 %v108, %v124
    %v128 = vmul.f32 %v111, %v124
    %v129 = vmul.f32 %v114, %v124
    %v130 = vmul.f32 %v117, %v124
    %v131 = vmul.f32 %v120, %v124
    %v132 = vmul.f32 %v123, %v124
    %v141 = vcombine.low %v125, %v126
    %v142 = vcombine.low %v127, %v128
    %v143 = vcombine.low %v129, %v130
    %v144 = vcombine.low %v131, %v132
    %v146 = vunpack.c.l.s4 1966171168
    %v147 = vunpack.c.0.s8 %v146
    %v148 = vlaneseq
    %v149 = vshrl.u32 %v148, 7
    %v150 = vsub.s32 %v147, %v149
    %v151 = vrot.slane %v141, %v150
    %v153 = vunpack.c.l.s4 1966171168
    %v154 = vunpack.c.0.s8 %v153
    %v155 = vlaneseq
    %v156 = vshrl.u32 %v155, 7
    %v157 = vsub.s32 %v154, %v156
    %v158 = vrot.slane %v142, %v157
    %v160 = vunpack.c.l.s4 1966171168
    %v161 = vunpack.c.0.s8 %v160
    %v162 = vlaneseq
    %v163 = vshrl.u32 %v162, 7
    %v164 = vsub.s32 %v161, %v163
    %v165 = vrot.slane %v143, %v164
    %v167 = vunpack.c.l.s4 1966171168
    %v168 = vunpack.c.0.s8 %v167
    %v169 = vlaneseq
    %v170 = vshrl.u32 %v169, 7
    %v171 = vsub.s32 %v168, %v170
    %v172 = vrot.slane %v144, %v171
    %v173 = vcombine.low %v151, %v158
    %v174 = vcombine.low %v165, %v172
    %v176 = vunpack.c.l.s4 1966171168
    %v177 = vunpack.c.0.s8 %v176
    %v178 = vlaneseq
    %v179 = vshrl.u32 %v178, 7
    %v180 = vsub.s32 %v177, %v179
    %v181 = vrot.slane %v173, %v180
    %v183 = vunpack.c.l.s4 1966171168
    %v184 = vunpack.c.0.s8 %v183
    %v185 = vlaneseq
    %v186 = vshrl.u32 %v185, 7
    %v187 = vsub.s32 %v184, %v186
    %v188 = vrot.slane %v174, %v187
    %v189 = vcombine.low %v181, %v188
    %v191 = vsub.f32 %v15, %v189
    %v192 = vsub.f32 %v16, %v189
    %v193 = vmul.f32 %v191, %v191
    %v194 = vmul.f32 %v192, %v192
    %v197 = vlaneseq
    %v198 = vshrl.u32 %v197, 7
    %v199 = vsub.s32 0, %v198
    %v200 = vrot.slane %v193, %v199
    %v201 = vlaneseq
    %v202 = vshrl.u32 %v201, 7
    %v203 = vsub.s32 1, %v202
    %v204 = vrot.slane %v193, %v203
    %v205 = vlaneseq
    %v206 = vshrl.u32 %v205, 7
    %v207 = vsub.s32 2, %v206
    %v208 = vrot.slane %v193, %v207
    %v209 = vlaneseq
    %v210 = vshrl.u32 %v209, 7
    %v211 = vsub.s32 3, %v210
    %v212 = vrot.slane %v193, %v211
    %v213 = vlaneseq
    %v214 = vshrl.u32 %v213, 7
    %v215 = vsub.s32 4, %v214
    %v216 = vrot.slane %v193, %v215
    %v217 = vlaneseq
    %v218 = vshrl.u32 %v217, 7
    %v219 = vsub.s32 5, %v218
    %v220 = vrot.slane %v193, %v219
    %v221 = vlaneseq
    %v222 = vshrl.u32 %v221, 7
    %v223 = vsub.s32 6, %v222
    %v224 = vrot.slane %v193, %v223
    %v225 = vlaneseq
    %v226 = vshrl.u32 %v225, 7
    %v227 = vsub.s32 7, %v226
    %v228 = vrot.slane %v193, %v227
    %v229 = vlaneseq
    %v230 = vshrl.u32 %v229, 7
    %v231 = vsub.s32 0, %v230
    %v232 = vrot.slane %v194, %v231
    %v233 = vlaneseq
    %v234 = vshrl.u32 %v233, 7
    %v235 = vsub.s32 1, %v234
    %v236 = vrot.slane %v194, %v235
    %v237 = vlaneseq
    %v238 = vshrl.u32 %v237, 7
    %v239 = vsub.s32 2, %v238
    %v240 = vrot.slane %v194, %v239
    %v241 = vlaneseq
    %v242 = vshrl.u32 %v241, 7
    %v243 = vsub.s32 3, %v242
    %v244 = vrot.slane %v194, %v243
    %v245 = vlaneseq
    %v246 = vshrl.u32 %v245, 7
    %v247 = vsub.s32 4, %v246
    %v248 = vrot.slane %v194, %v247
    %v249 = vlaneseq
    %v250 = vshrl.u32 %v249, 7
    %v251 = vsub.s32 5, %v250
    %v252 = vrot.slane %v194, %v251
    %v253 = vlaneseq
    %v254 = vshrl.u32 %v253, 7
    %v255 = vsub.s32 6, %v254
    %v256 = vrot.slane %v194, %v255
    %v257 = vlaneseq
    %v258 = vshrl.u32 %v257, 7
    %v259 = vsub.s32 7, %v258
    %v260 = vrot.slane %v194, %v259
    %v277 = vsel %vm99, %v200, 0.0
    %v278 = vsel %vm99, %v232, 0.0
    %v279 = vadd.f32 %v277, %v278
    %v280 = vsel %vm99, %v204, 0.0
    %v281 = vsel %vm99, %v236, 0.0
    %v282 = vadd.f32 %v280, %v281
    %v283 = vsel %vm99, %v208, 0.0
    %v284 = vsel %vm99, %v240, 0.0
    %v285 = vadd.f32 %v283, %v284
    %v286 = vsel %vm99, %v212, 0.0
    %v287 = vsel %vm99, %v244, 0.0
    %v288 = vadd.f32 %v286, %v287
    %v289 = vsel %vm99, %v216, 0.0
    %v290 = vsel %vm99, %v248, 0.0
    %v291 = vadd.f32 %v289, %v290
    %v292 = vsel %vm99, %v220, 0.0
    %v293 = vsel %vm99, %v252, 0.0
    %v294 = vadd.f32 %v292, %v293
    %v295 = vsel %vm99, %v224, 0.0
    %v296 = vsel %vm99, %v256, 0.0
    %v297 = vadd.f32 %v295, %v296
    %v298 = vsel %vm99, %v228, 0.0
    %v299 = vsel %vm99, %v260, 0.0
    %v300 = vadd.f32 %v298, %v299
    %v301 = vmul.f32 %v279, %v124
    %v302 = vmul.f32 %v282, %v124
    %v303 = vmul.f32 %v285, %v124
    %v304 = vmul.f32 %v288, %v124
    %v305 = vmul.f32 %v291, %v124
    %v306 = vmul.f32 %v294, %v124
    %v307 = vmul.f32 %v297, %v124
    %v308 = vmul.f32 %v300, %v124
    %v309 = vadd.f32 %v301, 1e-08
    %v310 = vadd.f32 %v302, 1e-08
    %v311 = vadd.f32 %v303, 1e-08
    %v312 = vadd.f32 %v304, 1e-08
    %v313 = vadd.f32 %v305, 1e-08
    %v314 = vadd.f32 %v306, 1e-08
    %v315 = vadd.f32 %v307, 1e-08
    %v316 = vadd.f32 %v308, 1e-08
    %v317 = vrsqrt.pop %v309
    %v318 = vmul.f32 %v309, %v317
    %vm319 = vcmp.eq.f32.partialorder %v309, inf
    %v320 = vsel %vm319, %v309, %v318
    %vm321 = vcmp.eq.f32.partialorder %v309, 0.0
    %v322 = vand.u32 %v309, 2147483648
    %v323 = vsel %vm321, %v322, %v320
    %v324 = vrsqrt.pop %v310
    %v325 = vmul.f32 %v310, %v324
    %vm326 = vcmp.eq.f32.partialorder %v310, inf
    %v327 = vsel %vm326, %v310, %v325
    %vm328 = vcmp.eq.f32.partialorder %v310, 0.0
    %v329 = vand.u32 %v310, 2147483648
    %v330 = vsel %vm328, %v329, %v327
    %v331 = vrsqrt.pop %v311
    %v332 = vmul.f32 %v311, %v331
    %vm333 = vcmp.eq.f32.partialorder %v311, inf
    %v334 = vsel %vm333, %v311, %v332
    %vm335 = vcmp.eq.f32.partialorder %v311, 0.0
    %v336 = vand.u32 %v311, 2147483648
    %v337 = vsel %vm335, %v336, %v334
    %v338 = vrsqrt.pop %v312
    %v339 = vmul.f32 %v312, %v338
    %vm340 = vcmp.eq.f32.partialorder %v312, inf
    %v341 = vsel %vm340, %v312, %v339
    %vm342 = vcmp.eq.f32.partialorder %v312, 0.0
    %v343 = vand.u32 %v312, 2147483648
    %v344 = vsel %vm342, %v343, %v341
    %v345 = vrsqrt.pop %v313
    %v346 = vmul.f32 %v313, %v345
    %vm347 = vcmp.eq.f32.partialorder %v313, inf
    %v348 = vsel %vm347, %v313, %v346
    %vm349 = vcmp.eq.f32.partialorder %v313, 0.0
    %v350 = vand.u32 %v313, 2147483648
    %v351 = vsel %vm349, %v350, %v348
    %v352 = vrsqrt.pop %v314
    %v353 = vmul.f32 %v314, %v352
    %vm354 = vcmp.eq.f32.partialorder %v314, inf
    %v355 = vsel %vm354, %v314, %v353
    %vm356 = vcmp.eq.f32.partialorder %v314, 0.0
    %v357 = vand.u32 %v314, 2147483648
    %v358 = vsel %vm356, %v357, %v355
    %v359 = vrsqrt.pop %v315
    %v360 = vmul.f32 %v315, %v359
    %vm361 = vcmp.eq.f32.partialorder %v315, inf
    %v362 = vsel %vm361, %v315, %v360
    %vm363 = vcmp.eq.f32.partialorder %v315, 0.0
    %v364 = vand.u32 %v315, 2147483648
    %v365 = vsel %vm363, %v364, %v362
    %v366 = vrsqrt.pop %v316
    %v367 = vmul.f32 %v316, %v366
    %vm368 = vcmp.eq.f32.partialorder %v316, inf
    %v369 = vsel %vm368, %v316, %v367
    %vm370 = vcmp.eq.f32.partialorder %v316, 0.0
    %v371 = vand.u32 %v316, 2147483648
    %v372 = vsel %vm370, %v371, %v369
    %v373 = vld [vmem:[#allocation2] sm:$0x1]
    %v374 = vsel %vm99, %v323, 0.0
    %v375 = vsel %vm99, %v330, 0.0
    %v376 = vadd.f32 %v374, %v375
    %v377 = vsel %vm99, %v337, 0.0
    %v378 = vadd.f32 %v376, %v377
    %v379 = vsel %vm99, %v344, 0.0
    %v380 = vadd.f32 %v378, %v379
    %v381 = vsel %vm99, %v351, 0.0
    %v382 = vadd.f32 %v380, %v381
    %v383 = vsel %vm99, %v358, 0.0
    %v384 = vadd.f32 %v382, %v383
    %v385 = vsel %vm99, %v365, 0.0
    %v386 = vadd.f32 %v384, %v385
    %v387 = vsel %vm99, %v372, 0.0
    %v388 = vadd.f32 %v386, %v387
    %389 = vadd.xlane.f32.xlu0 %v388
    %v390 = vpop.xlane.xlu0 %389
    %v391 = vmul.f32 %v390, 0.0009765625
    %v392 = vadd.f32 %v373, %v391
    %vm393 = vcmask 0
    %394 = vst.msk [vmem:[#allocation2] sm:$0x1] %vm393, %v392
    // Predicated region
    $region10: #{minibatch_std_mean.2} parent=1 // pred_check
      _
    $region11: #{minibatch_std_mean.2} parent=1 // pred_check_branch
      %396 = sbr.rel (0) target = $region13
    $region12: #{minibatch_std_mean.2} parent=1 // pred_region
      %s398 = ssub.s32 16, 16
      %399 = vsyncadd [#allocation3], %s398
      %s401 = sshll.u32 [#allocation2], 4
      %s402 = int_to_ptr.vmem [resolvable:$true] %s401
      %404 = dma.vmem_to_hbm [thread:$0]  %s402, 16, %s1, [#allocation3]
    $region13: #{minibatch_std_mean.2} parent=1 // pred_fallthru
      _
    // Predicated region
    $region14: #{minibatch_std_mean.2} parent=1 // pred_check
      _
    $region15: #{minibatch_std_mean.2} parent=1 // pred_check_branch
      %406 = sbr.rel (0) target = $region17
    $region16: #{minibatch_std_mean.2} parent=1 // pred_region
      %407 = dma.done [#allocation3], 16
    $region17: #{minibatch_std_mean.2} parent=1 // pred_fallthru
      _
    %408 = vsyncpa [#allocation3], 1

</llo_original>
